<compile_context>
chip_gen: v7x
topology: tpu7x:2x2x1
jax: 0.10.0
libtpu: 0.0.40
codegen_flags: <defaults>
</compile_context>

<pallas_src>
import functools

import jax
import jax.numpy as jnp
from jax.experimental import pallas as pl
from jax.experimental.pallas import tpu as pltpu


# ~4 MiB per tile: 2 arrays (in + out) x 2 pipeline buffers ~= 16 MiB, safely
# under the 32 MiB default scoped VMEM on every generation (incl. v7x).
_TARGET_TILE_BYTES = 4 * 1024 * 1024


def _round_up(x, m):
    return (x + m - 1) // m * m


def _choose_block(nc, hw, itemsize):
    """Pick (rows, cols) for tiling the (nc, hw) view.

    cols: full hw when 8 rows of it fit the budget (lane-dense, single column
          block); otherwise the largest multiple-of-128 divisor of hw that
          fits, so stores stay unmasked.
    rows: multiple of 8 (sublane tiling), sized so rows*cols*itemsize is a few
          MiB, clamped to the (padded) number of channels.
    """
    cols = hw
    if hw * 8 * itemsize > _TARGET_TILE_BYTES and hw % 128 == 0:
        cols = 128
        for cand in range(hw, 0, -128):
            if hw % cand == 0 and cand * 8 * itemsize <= _TARGET_TILE_BYTES:
                cols = cand
                break
    rows = max(8, (_TARGET_TILE_BYTES // (cols * itemsize)) // 8 * 8)
    rows = min(rows, _round_up(nc, 8))
    return rows, cols


def _dropout2d_kernel(scale_ref, x_ref, o_ref):
    # scale_ref: (ROWS, 1) float32 VMEM block -> broadcasts along the lane axis.
    # x_ref / o_ref: (ROWS, COLS) VMEM tile in x.dtype.
    # Multiply happens in f32 (promotion), then cast back to the output dtype.
    o_ref[...] = (x_ref[...] * scale_ref[...]).astype(o_ref.dtype)


@functools.partial(jax.jit, static_argnames=("p", "training"))
def dropout2d_pallas(x, key, *, p: float, training: bool):
    """Channel-wise (2D) dropout matching torch.nn.functional.dropout2d."""
    if (not training) or p == 0.0:
        return x
    if p >= 1.0:
        # Every channel is dropped; no need to launch the kernel.
        return jnp.zeros_like(x)

    n, c, h, w = x.shape
    nc = n * c
    hw = h * w
    itemsize = jnp.dtype(x.dtype).itemsize

    # Per-(n, c) Bernoulli keep mask + float32 scale (tiny glue, plain JAX).
    # NOTE: uses JAX's RNG, so masks won't bit-match torch for a given seed.
    keep = jax.random.bernoulli(key, 1.0 - p, shape=(nc,))
    scale = keep.astype(jnp.float32) * jnp.float32(1.0 / (1.0 - p))
    scale = scale.reshape(nc, 1)

    # 2D lane-dense view: channels on sublanes, spatial plane on lanes.
    x2d = x.reshape(nc, hw)

    rows, cols = _choose_block(nc, hw, itemsize)

    # Ragged tail: pad the channel axis so every block is full (keeps the
    # (8, 128)-aligned fast path); padded rows multiply to zero and are sliced
    # off afterwards.
    nc_pad = _round_up(nc, rows)
    if nc_pad != nc:
        x2d = jnp.pad(x2d, ((0, nc_pad - nc), (0, 0)))
        scale = jnp.pad(scale, ((0, nc_pad - nc), (0, 0)))

    grid = (nc_pad // rows, hw // cols)

    out2d = pl.pallas_call(
        _dropout2d_kernel,
        out_shape=jax.ShapeDtypeStruct((nc_pad, hw), x.dtype),
        grid=grid,
        in_specs=[
            pl.BlockSpec((rows, 1), lambda i, j: (i, 0)),      # f32 scales (VMEM)
            pl.BlockSpec((rows, cols), lambda i, j: (i, j)),   # data tile
        ],
        out_specs=pl.BlockSpec((rows, cols), lambda i, j: (i, j)),
        compiler_params=pltpu.CompilerParams(
            dimension_semantics=("parallel", "parallel")),
        cost_estimate=pl.CostEstimate(
            flops=nc_pad * hw,
            transcendentals=0,
            bytes_accessed=2 * nc_pad * hw * itemsize + nc_pad * 4,
        ),
        # input_output_aliases={1: 0} would save an HBM allocation, but when x
        # is a non-donated jit argument XLA inserts a full copy instead, so it
        # is left off by default.
    )(scale, x2d)

    if nc_pad != nc:
        out2d = out2d[:nc]
    return out2d.reshape(n, c, h, w)


class Fixable2DDropout:
    """JAX/Pallas port of advchain's Fixable2DDropout.

    `inplace` has no meaning in functional JAX (always out-of-place).
    `lazy_load=True` reuses the last generated seed (i.e. same dropout mask).
    """

    def __init__(self, p: float = 0.5, inplace: bool = False,
                 lazy_load: bool = False, training: bool = True):
        if p < 0 or p > 1:
            raise ValueError(
                "dropout probability has to be between 0 and 1, but got {}".format(p))
        self.p = p
        self.inplace = inplace          # no-op in JAX (functional semantics)
        self.lazy_load = lazy_load
        self.training = training
        self.seed = None
        self._fresh_seed = 0            # deterministic stand-in for torch.seed()

    def forward(self, X):
        if self.training and self.lazy_load and self.seed is not None:
            seed = self.seed
        else:
            seed = self._fresh_seed
            self._fresh_seed += 1
        self.seed = seed
        key = jax.random.PRNGKey(seed)
        return dropout2d_pallas(X, key, p=self.p, training=self.training)

    __call__ = forward


if __name__ == "__main__":
    key = jax.random.PRNGKey(0)
    N, C, H, W = 2, 4, 16, 16
    x = jax.random.normal(key, (N, C, H, W), dtype=jnp.float32)

    layer = Fixable2DDropout(p=0.5, lazy_load=True, training=True)

    y = layer(x)
    y = jax.block_until_ready(y)

    # Sanity checks: every (n, c) slab is either all-zero or x * 1/(1-p).
    scale = 1.0 / (1.0 - layer.p)
    y_np = jax.device_get(y)
    x_np = jax.device_get(x)
    for nn_ in range(N):
        for cc in range(C):
            slab = y_np[nn_, cc]
            ref_keep = x_np[nn_, cc] * scale
            is_zero = bool((abs(slab) < 1e-6).all())
            is_scaled = bool((abs(slab - ref_keep) < 1e-4).all())
            assert is_zero or is_scaled, "channel not dropped-whole or scaled-whole"

    # lazy_load=True: second call with stored seed must reproduce the same mask.
    y2 = jax.block_until_ready(layer(x))
    assert bool(jnp.allclose(y, y2)), "lazy_load mask reuse failed"

    # eval mode: identity.
    layer_eval = Fixable2DDropout(p=0.5, training=False)
    y_eval = jax.block_until_ready(layer_eval(x))
    assert bool(jnp.allclose(y_eval, x)), "eval mode should be identity"

    # p=1.0: everything dropped.
    layer_all = Fixable2DDropout(p=1.0, training=True)
    y_all = jax.block_until_ready(layer_all(x))
    assert bool(jnp.all(y_all == 0)), "p=1.0 should zero everything"

    print("KERNEL_OK")
</pallas_src>

<mosaic_0001>
module attributes {stable_mosaic.version = 11 : i64} {
  func.func @_dropout2d_kernel(%arg0: i32, %arg1: i32, %arg2: memref<8x1xf32, #tpu.memory_space<vmem>>, %arg3: memref<8x256xf32, #tpu.memory_space<vmem>>, %arg4: memref<8x256xf32, #tpu.memory_space<vmem>>) attributes {dimension_semantics = [#tpu.dimension_semantics<parallel>, #tpu.dimension_semantics<parallel>], iteration_bounds = array<i64: 1, 1>, scalar_prefetch = 0 : i64, scratch_operands = 0 : i64, tpu.core_type = #tpu.core_type<tc>, window_params = [{transform_indices = @transform_0, window_bounds = array<i64: 8, 1>}, {transform_indices = @transform_1, window_bounds = array<i64: 8, 256>}, {transform_indices = @transform_2, window_bounds = array<i64: 8, 256>}]} {
    %c0 = arith.constant 0 : index
    %c0_0 = arith.constant 0 : index
    %0 = vector.load %arg3[%c0, %c0_0] : memref<8x256xf32, #tpu.memory_space<vmem>>, vector<8x256xf32>
    %c0_1 = arith.constant 0 : index
    %c0_2 = arith.constant 0 : index
    %1 = vector.load %arg2[%c0_1, %c0_2] : memref<8x1xf32, #tpu.memory_space<vmem>>, vector<8x1xf32>
    %2 = vector.broadcast %1 : vector<8x1xf32> to vector<8x256xf32>
    %3 = arith.mulf %0, %2 : vector<8x256xf32>
    %c0_3 = arith.constant 0 : index
    %c0_4 = arith.constant 0 : index
    %4 = vector.load %arg4[%c0_3, %c0_4] : memref<8x256xf32, #tpu.memory_space<vmem>>, vector<8x256xf32>
    tpu.vector_store %arg4[%c0_3, %c0_4], %3 {strides = array<i32>} : memref<8x256xf32, #tpu.memory_space<vmem>>, vector<8x256xf32>,
    return
  }
  func.func @transform_0(%arg0: i32, %arg1: i32) -> (i32, i32) {
    %c0_i32 = arith.constant 0 : i32
    %c0_i32_0 = arith.constant 0 : i32
    return %arg0, %c0_i32 : i32, i32
  }
  func.func @transform_1(%arg0: i32, %arg1: i32) -> (i32, i32) {
    %c0_i32 = arith.constant 0 : i32
    return %arg0, %arg1 : i32, i32
  }
  func.func @transform_2(%arg0: i32, %arg1: i32) -> (i32, i32) {
    %c0_i32 = arith.constant 0 : i32
    return %arg0, %arg1 : i32, i32
  }
}

</mosaic_0001>

<llo_original>
// kernel: dropout2d_pallas.1
$region0: #{dropout2d_pallas.1}
  #allocation0 [shape = 'u32[]', space=smem, size = 0x4, offset = 0x4, fixed_abs, tag = 'smem constant byte address 0x4 - core index']
  #allocation1 [shape = 'u32[144,128]{1,0:T(1,128)}', space=vmem, size = 0x12000, scoped, tag = 'internal scratch']
  %s0 = inlined_call_operand.vmem [shape: f32[8,1], index: 0, kind: input, shape index: {}]
  %s1 = inlined_call_operand.vmem [shape: f32[8,256], index: 1, kind: input, shape index: {}]
  %s2 = inlined_call_operand.vmem [shape: f32[8,256], index: 2, kind: output, shape index: {}]
  %s3 = sld [smem:[#allocation0]]
  $region18: #{dropout2d_pallas.1} parent=0
    _
  %s5 = ssub.s32 1, %s3
  %s6 = scalar_select 0, %s5, %s3
  // Predicated region
  $region2: #{dropout2d_pallas.1} parent=0 // pred_check
    _
  $region3: #{dropout2d_pallas.1} parent=0 // pred_check_branch
    %8 = sbr.rel (0) target = $region5
  $region4: #{dropout2d_pallas.1} parent=0 // pred_region
    _
  $region5: #{dropout2d_pallas.1} parent=0 // pred_fallthru
    _
  // Predicated region
  $region6: #{dropout2d_pallas.1} parent=0 // pred_check
    _
  $region7: #{dropout2d_pallas.1} parent=0 // pred_check_branch
    %10 = sbr.rel (0) target = $region9
  $region8: #{dropout2d_pallas.1} parent=0 // pred_region
    _
  $region9: #{dropout2d_pallas.1} parent=0 // pred_fallthru
    _
  %v11 = vld [vmem:[%s1] sm:$0xff]
  %v12 = vld [vmem:[%s1 + $0x8] sm:$0xff]
  %v13 = vld [vmem:[%s0] sm:$0xff]
  %15 = vset.pattern.permute.xlu0 0
  %16 = vperm.xlu0 %15, %v13
  %v17 = vpop.permute.xlu0 %16
  %v19 = vmul.f32 %v11, %v17
  %v20 = vmul.f32 %v12, %v17
  %21 = vst [vmem:[%s2] sm:$0xff] %v19
  %22 = vst [vmem:[%s2 + $0x8] sm:$0xff] %v20
  // Predicated region
  $region10: #{dropout2d_pallas.1} parent=0 // pred_check
    _
  $region11: #{dropout2d_pallas.1} parent=0 // pred_check_branch
    %24 = sbr.rel (0) target = $region13
  $region12: #{dropout2d_pallas.1} parent=0 // pred_region
    _
  $region13: #{dropout2d_pallas.1} parent=0 // pred_fallthru
    _
  // Predicated region
  $region14: #{dropout2d_pallas.1} parent=0 // pred_check
    _
  $region15: #{dropout2d_pallas.1} parent=0 // pred_check_branch
    %26 = sbr.rel (0) target = $region17
  $region16: #{dropout2d_pallas.1} parent=0 // pred_region
    _
  $region17: #{dropout2d_pallas.1} parent=0 // pred_fallthru
    _

</llo_original>
